<compile_context>
chip_gen: v5e
topology: v5e:2x2
jax: 0.10.0
libtpu: 0.0.40
codegen_flags: <defaults>
</compile_context>

<pallas_src>
import jax
import jax.numpy as jnp
from jax.experimental import pallas as pl
from jax.experimental.pallas import tpu as pltpu


# ---------------------------------------------------------------------------
# tanh-approximate GELU: 0.5*x*(1+tanh(sqrt(2/pi)*(x+0.044715*x^3)))
def _gelu_tanh(x):
    c = 0.7978845608028654  # sqrt(2/pi)
    return 0.5 * x * (1.0 + jnp.tanh(c * (x + 0.044715 * x * x * x)))


# ---------------------------------------------------------------------------
# Bilinear (align_corners=True) 1-D resampling matrix M with y = M @ x.
def interp_matrix(out_size, in_size, dtype=jnp.float32):
    if out_size == 1:
        src = jnp.zeros((1,), jnp.float32)
    else:
        scale = (in_size - 1) / (out_size - 1)
        src = jnp.arange(out_size, dtype=jnp.float32) * jnp.float32(scale)
    i0 = jnp.clip(jnp.floor(src), 0.0, in_size - 1).astype(jnp.int32)
    i1 = jnp.minimum(i0 + 1, in_size - 1)
    frac = src - i0.astype(jnp.float32)
    cols = jnp.arange(in_size)
    m0 = (cols[None, :] == i0[:, None]).astype(dtype) * (1.0 - frac)[:, None].astype(dtype)
    m1 = (cols[None, :] == i1[:, None]).astype(dtype) * frac[:, None].astype(dtype)
    return (m0 + m1).astype(dtype)


# ---------------------------------------------------------------------------
# Fused kernel (single grid-less step).  Ref shapes:
#   x_ref   : (B*C, H*W)  f32   rows = (batch, channel), lanes = flattened (h, w)
#   d_ref   : (H*W, C*C)  bf16  combined bilinear downsample matrix
#   w1_ref  : (B*C, B*C)  bf16  kron(I_B, w1)  (block-diagonal 1x1 conv)
#   b1_ref  : (B*C, C*C)  f32   lane-dense bias slab
#   w2_ref  : (B*C, B*C)  bf16  kron(I_B, w2)
#   b2_ref  : (B*C, C*C)  f32
#   w3b_ref : (C*C, C*C)  bf16  conv3 folded into block matrix w3 (x) I_C
#   b3_ref  : (B*C, C*C)  f32
#   u_ref   : (C*C, H*W)  bf16  combined bilinear upsample matrix
#   o_ref   : (B*C, H*W)  f32
def _gobal_fused_kernel(x_ref, d_ref, w1_ref, b1_ref, w2_ref, b2_ref,
                        w3b_ref, b3_ref, u_ref, o_ref):
    f32, bf16 = jnp.float32, jnp.bfloat16
    x = x_ref[...]                                               # (B*C, H*W) f32

    # bilinear downsample (align_corners=True): lanes (h,w) -> (i,j)
    cube = jnp.dot(x.astype(bf16), d_ref[...],
                   preferred_element_type=f32)                   # (B*C, C*C)

    # conv1 (1x1, block-diagonal over batch) + GELU
    t1 = _gelu_tanh(jnp.dot(w1_ref[...], cube.astype(bf16),
                            preferred_element_type=f32) + b1_ref[...])

    # conv2 (1x1) + GELU  (PyTorch's permutes only relabel lane indices)
    t2 = _gelu_tanh(jnp.dot(w2_ref[...], t1.astype(bf16),
                            preferred_element_type=f32) + b2_ref[...])

    # conv3 contracts the downsampled-H index buried in the (i,j) lane packing,
    # expressed as one matmul with the block matrix w3 (x) I_C; + Sigmoid.
    g = jax.nn.sigmoid(jnp.dot(t2.astype(bf16), w3b_ref[...],
                               preferred_element_type=f32) + b3_ref[...])

    # bilinear upsample back to (h, w) lanes and gate the input.
    gate = jnp.dot(g.astype(bf16), u_ref[...],
                   preferred_element_type=f32)                   # (B*C, H*W)
    o_ref[...] = (x * gate).astype(o_ref.dtype)


# ---------------------------------------------------------------------------
def prepare_gobal_params(params, B, C, H, W):
    """One-time host-side weight transforms (call once, reuse every forward)."""
    f32, bf16 = jnp.float32, jnp.bfloat16
    HW, CC, BC = H * W, C * C, B * C
    w1, b1, w2, b2, w3, b3 = params            # weights (C, C), biases (1, C)

    dh = interp_matrix(C, H)                   # (C, H)
    dw = interp_matrix(C, W)                   # (C, W)
    rh = interp_matrix(H, C)                   # (H, C)
    rw = interp_matrix(W, C)                   # (W, C)

    # Combined separable resize matrices:
    #   D[(h,w),(i,j)]  = dh[i,h] * dw[j,w]    (downsample, right-multiply)
    #   U[(o3,j),(y,z)] = rh[y,o3] * rw[z,j]   (upsample,  right-multiply)
    dmat = jnp.einsum('ih,jw->hwij', dh, dw).reshape(HW, CC).astype(bf16)
    umat = jnp.einsum('yo,zj->ojyz', rh, rw).reshape(CC, HW).astype(bf16)

    # conv1/conv2 as block-diagonal left matmuls over the (batch, channel) rows.
    eye_b = jnp.eye(B, dtype=f32)
    w1blk = jnp.kron(eye_b, w1.astype(f32)).astype(bf16)         # (B*C, B*C)
    w2blk = jnp.kron(eye_b, w2.astype(f32)).astype(bf16)         # (B*C, B*C)

    # conv3 block matrix: W3blk[(i,j'),(o3,j)] = w3[o3,i] * (j'==j).
    # NOTE: grows as C^4 -- 8 KiB at C=8; reformulate for large C (see header).
    w3blk = jnp.einsum('oi,jk->ijok', w3.astype(f32),
                       jnp.eye(C, dtype=f32)).reshape(CC, CC).astype(bf16)

    # Lane-dense bias slabs (B*C, C*C).
    b1f = jnp.broadcast_to(jnp.tile(b1.reshape(C, 1), (B, 1)), (BC, CC)).astype(f32)
    b2f = jnp.broadcast_to(jnp.tile(b2.reshape(C, 1), (B, 1)), (BC, CC)).astype(f32)
    b3f = jnp.broadcast_to(jnp.repeat(b3.reshape(C), C).reshape(1, CC),
                           (BC, CC)).astype(f32)                 # [(o3,j)] = b3[o3]

    return (dmat, w1blk, b1f, w2blk, b2f, w3blk, b3f, umat)


def gobal_forward(x, kparams):
    """Gobal.forward. x: (B, C, H, W) f32 NCHW; kparams from prepare_gobal_params."""
    B, C, H, W = x.shape
    HW = H * W
    dmat, w1blk, b1f, w2blk, b2f, w3blk, b3f, umat = kparams
    x2 = x.astype(jnp.float32).reshape(B * C, HW)   # free reshape; lane dim = H*W

    vmem = pl.BlockSpec(memory_space=pltpu.MemorySpace.VMEM)   # whole array in VMEM
    out = pl.pallas_call(
        _gobal_fused_kernel,
        out_shape=jax.ShapeDtypeStruct((B * C, HW), jnp.float32),
        in_specs=[vmem] * 9,
        out_specs=vmem,
    )(x2, dmat, w1blk, b1f, w2blk, b2f, w3blk, b3f, umat)
    return out.reshape(B, C, H, W)


# ---------------------------------------------------------------------------
# Pure-JAX reference: direct transliteration of the PyTorch forward (NCHW),
# exact (erf) GELU as in nn.GELU().
def gobal_reference(x, params):
    B, C, H, W = x.shape
    w1, b1, w2, b2, w3, b3 = params
    b1, b2, b3 = b1.reshape(C), b2.reshape(C), b3.reshape(C)
    dh, dw = interp_matrix(C, H), interp_matrix(C, W)
    rh, rw = interp_matrix(H, C), interp_matrix(W, C)
    gelu = lambda v: jax.nn.gelu(v, approximate=False)

    y = jnp.einsum('ih,jw,bchw->bcij', dh, dw, x)                     # -> (C, C)
    y = jnp.einsum('oc,bcij->boij', w1, y) + b1[None, :, None, None]
    y = jnp.transpose(gelu(y), (0, 1, 3, 2))
    y = jnp.einsum('oc,bcij->boij', w2, y) + b2[None, :, None, None]
    y = jnp.transpose(gelu(y), (0, 3, 2, 1))
    y = jnp.einsum('oc,bcij->boij', w3, y) + b3[None, :, None, None]
    y = jnp.transpose(jax.nn.sigmoid(y), (0, 3, 1, 2))
    y = jnp.einsum('pi,qj,bcij->bcpq', rh, rw, y)                     # -> (H, W)
    return x * y


# ---------------------------------------------------------------------------
if __name__ == "__main__":
    B, C, H, W = 2, 8, 16, 16        # dim = C = 8
    key = jax.random.PRNGKey(0)
    ks = jax.random.split(key, 7)
    x = jax.random.normal(ks[0], (B, C, H, W), dtype=jnp.float32)

    def conv_params(kw, kb):
        # nn.Conv2d(dim, dim, 1): weight (dim, dim, 1, 1) squeezed to (dim, dim);
        # bias (dim,) stored as (1, dim).
        bound = 1.0 / (C ** 0.5)
        w = jax.random.uniform(kw, (C, C), jnp.float32, -bound, bound)
        b = jax.random.uniform(kb, (1, C), jnp.float32, -bound, bound)
        return w, b

    w1, b1 = conv_params(ks[1], ks[2])
    w2, b2 = conv_params(ks[3], ks[4])
    w3, b3 = conv_params(ks[5], ks[6])
    params = (w1, b1, w2, b2, w3, b3)

    # One-time weight transforms, hoisted out of the per-call path.
    kparams = jax.block_until_ready(prepare_gobal_params(params, B, C, H, W))

    fwd = jax.jit(gobal_forward)
    out = jax.block_until_ready(fwd(x, kparams))
    assert out.shape == (B, C, H, W) and out.dtype == jnp.float32

    ref = gobal_reference(x, params)
    if not jnp.allclose(out, ref, atol=5e-2, rtol=5e-2):
        raise AssertionError(
            f"kernel/reference mismatch: max abs err = {jnp.max(jnp.abs(out - ref))}")
    print("KERNEL_OK")
</pallas_src>

<mosaic_0001>
module attributes {stable_mosaic.version = 11 : i64} {
  func.func @_gobal_fused_kernel(%arg0: memref<16x256xf32, #tpu.memory_space<vmem>>, %arg1: memref<256x64xbf16, #tpu.memory_space<vmem>>, %arg2: memref<16x16xbf16, #tpu.memory_space<vmem>>, %arg3: memref<16x64xf32, #tpu.memory_space<vmem>>, %arg4: memref<16x16xbf16, #tpu.memory_space<vmem>>, %arg5: memref<16x64xf32, #tpu.memory_space<vmem>>, %arg6: memref<64x64xbf16, #tpu.memory_space<vmem>>, %arg7: memref<16x64xf32, #tpu.memory_space<vmem>>, %arg8: memref<64x256xbf16, #tpu.memory_space<vmem>>, %arg9: memref<16x256xf32, #tpu.memory_space<vmem>>) attributes {dimension_semantics = [], scalar_prefetch = 0 : i64, scratch_operands = 0 : i64, tpu.core_type = #tpu.core_type<tc>} {
    %c0 = arith.constant 0 : index
    %c0_0 = arith.constant 0 : index
    %0 = vector.load %arg0[%c0, %c0_0] : memref<16x256xf32, #tpu.memory_space<vmem>>, vector<16x256xf32>
    %1 = arith.truncf %0 : vector<16x256xf32> to vector<16x256xbf16>
    %c0_1 = arith.constant 0 : index
    %c0_2 = arith.constant 0 : index
    %2 = vector.load %arg1[%c0_1, %c0_2] : memref<256x64xbf16, #tpu.memory_space<vmem>>, vector<256x64xbf16>
    %cst = arith.constant dense<0.000000e+00> : vector<16x64xf32>
    %3 = tpu.matmul %1, %2, %cst {dimension_numbers = #tpu.dot_dimension_numbers<[1], [0], [0], [1], [0, 0, 1, 1], [], []>} : vector<16x256xbf16>, vector<256x64xbf16>, vector<16x64xf32> -> vector<16x64xf32>
    %c0_3 = arith.constant 0 : index
    %c0_4 = arith.constant 0 : index
    %4 = vector.load %arg2[%c0_3, %c0_4] : memref<16x16xbf16, #tpu.memory_space<vmem>>, vector<16x16xbf16>
    %5 = arith.truncf %3 : vector<16x64xf32> to vector<16x64xbf16>
    %cst_5 = arith.constant dense<0.000000e+00> : vector<16x64xf32>
    %6 = tpu.matmul %4, %5, %cst_5 {dimension_numbers = #tpu.dot_dimension_numbers<[1], [0], [0], [1], [0, 0, 1, 1], [], []>} : vector<16x16xbf16>, vector<16x64xbf16>, vector<16x64xf32> -> vector<16x64xf32>
    %c0_6 = arith.constant 0 : index
    %c0_7 = arith.constant 0 : index
    %7 = vector.load %arg3[%c0_6, %c0_7] : memref<16x64xf32, #tpu.memory_space<vmem>>, vector<16x64xf32>
    %8 = arith.addf %6, %7 : vector<16x64xf32>
    %cst_8 = arith.constant 5.000000e-01 : f32
    %9 = vector.broadcast %cst_8 : f32 to vector<16x64xf32>
    %10 = arith.mulf %9, %8 : vector<16x64xf32>
    %cst_9 = arith.constant 4.471500e-02 : f32
    %11 = vector.broadcast %cst_9 : f32 to vector<16x64xf32>
    %12 = arith.mulf %11, %8 : vector<16x64xf32>
    %13 = arith.mulf %12, %8 : vector<16x64xf32>
    %14 = arith.mulf %13, %8 : vector<16x64xf32>
    %15 = arith.addf %8, %14 : vector<16x64xf32>
    %cst_10 = arith.constant 0.797884583 : f32
    %16 = vector.broadcast %cst_10 : f32 to vector<16x64xf32>
    %17 = arith.mulf %16, %15 : vector<16x64xf32>
    %18 = math.tanh %17 : vector<16x64xf32>
    %cst_11 = arith.constant 1.000000e+00 : f32
    %19 = vector.broadcast %cst_11 : f32 to vector<16x64xf32>
    %20 = arith.addf %19, %18 : vector<16x64xf32>
    %21 = arith.mulf %10, %20 : vector<16x64xf32>
    %c0_12 = arith.constant 0 : index
    %c0_13 = arith.constant 0 : index
    %22 = vector.load %arg4[%c0_12, %c0_13] : memref<16x16xbf16, #tpu.memory_space<vmem>>, vector<16x16xbf16>
    %23 = arith.truncf %21 : vector<16x64xf32> to vector<16x64xbf16>
    %cst_14 = arith.constant dense<0.000000e+00> : vector<16x64xf32>
    %24 = tpu.matmul %22, %23, %cst_14 {dimension_numbers = #tpu.dot_dimension_numbers<[1], [0], [0], [1], [0, 0, 1, 1], [], []>} : vector<16x16xbf16>, vector<16x64xbf16>, vector<16x64xf32> -> vector<16x64xf32>
    %c0_15 = arith.constant 0 : index
    %c0_16 = arith.constant 0 : index
    %25 = vector.load %arg5[%c0_15, %c0_16] : memref<16x64xf32, #tpu.memory_space<vmem>>, vector<16x64xf32>
    %26 = arith.addf %24, %25 : vector<16x64xf32>
    %cst_17 = arith.constant 5.000000e-01 : f32
    %27 = vector.broadcast %cst_17 : f32 to vector<16x64xf32>
    %28 = arith.mulf %27, %26 : vector<16x64xf32>
    %cst_18 = arith.constant 4.471500e-02 : f32
    %29 = vector.broadcast %cst_18 : f32 to vector<16x64xf32>
    %30 = arith.mulf %29, %26 : vector<16x64xf32>
    %31 = arith.mulf %30, %26 : vector<16x64xf32>
    %32 = arith.mulf %31, %26 : vector<16x64xf32>
    %33 = arith.addf %26, %32 : vector<16x64xf32>
    %cst_19 = arith.constant 0.797884583 : f32
    %34 = vector.broadcast %cst_19 : f32 to vector<16x64xf32>
    %35 = arith.mulf %34, %33 : vector<16x64xf32>
    %36 = math.tanh %35 : vector<16x64xf32>
    %cst_20 = arith.constant 1.000000e+00 : f32
    %37 = vector.broadcast %cst_20 : f32 to vector<16x64xf32>
    %38 = arith.addf %37, %36 : vector<16x64xf32>
    %39 = arith.mulf %28, %38 : vector<16x64xf32>
    %40 = arith.truncf %39 : vector<16x64xf32> to vector<16x64xbf16>
    %c0_21 = arith.constant 0 : index
    %c0_22 = arith.constant 0 : index
    %41 = vector.load %arg6[%c0_21, %c0_22] : memref<64x64xbf16, #tpu.memory_space<vmem>>, vector<64x64xbf16>
    %cst_23 = arith.constant dense<0.000000e+00> : vector<16x64xf32>
    %42 = tpu.matmul %40, %41, %cst_23 {dimension_numbers = #tpu.dot_dimension_numbers<[1], [0], [0], [1], [0, 0, 1, 1], [], []>} : vector<16x64xbf16>, vector<64x64xbf16>, vector<16x64xf32> -> vector<16x64xf32>
    %c0_24 = arith.constant 0 : index
    %c0_25 = arith.constant 0 : index
    %43 = vector.load %arg7[%c0_24, %c0_25] : memref<16x64xf32, #tpu.memory_space<vmem>>, vector<16x64xf32>
    %44 = arith.addf %42, %43 : vector<16x64xf32>
    %45 = arith.negf %44 : vector<16x64xf32>
    %46 = math.exp %45 : vector<16x64xf32>
    %cst_26 = arith.constant 1.000000e+00 : f32
    %47 = vector.broadcast %cst_26 : f32 to vector<16x64xf32>
    %48 = arith.addf %47, %46 : vector<16x64xf32>
    %49 = arith.divf %47, %48 : vector<16x64xf32>
    %50 = arith.truncf %49 : vector<16x64xf32> to vector<16x64xbf16>
    %c0_27 = arith.constant 0 : index
    %c0_28 = arith.constant 0 : index
    %51 = vector.load %arg8[%c0_27, %c0_28] : memref<64x256xbf16, #tpu.memory_space<vmem>>, vector<64x256xbf16>
    %cst_29 = arith.constant dense<0.000000e+00> : vector<16x256xf32>
    %52 = tpu.matmul %50, %51, %cst_29 {dimension_numbers = #tpu.dot_dimension_numbers<[1], [0], [0], [1], [0, 0, 1, 1], [], []>} : vector<16x64xbf16>, vector<64x256xbf16>, vector<16x256xf32> -> vector<16x256xf32>
    %53 = arith.mulf %0, %52 : vector<16x256xf32>
    %c0_30 = arith.constant 0 : index
    %c0_31 = arith.constant 0 : index
    %54 = vector.load %arg9[%c0_30, %c0_31] : memref<16x256xf32, #tpu.memory_space<vmem>>, vector<16x256xf32>
    tpu.vector_store %arg9[%c0_30, %c0_31], %53 {strides = array<i32>} : memref<16x256xf32, #tpu.memory_space<vmem>>, vector<16x256xf32>,
    return
  }
}

</mosaic_0001>

<llo_original>
// kernel: gobal_forward.1
$region0: #{gobal_forward.1}
  #allocation0 [shape = 'u32[]', space=smem, size = 0x4, offset = 0x4, fixed_abs, tag = 'smem constant byte address 0x4 - core index']
  #allocation1 [shape = 'u32[72,128]{1,0:T(1,128)}', space=vmem, size = 0x9000, scoped, tag = 'internal scratch']
  %s0 = inlined_call_operand.vmem [shape: f32[16,256], index: 0, kind: input, shape index: {}]
  %s1 = inlined_call_operand.vmem [shape: bf16[256,64], index: 1, kind: input, shape index: {}]
  %s2 = inlined_call_operand.vmem [shape: bf16[16,16], index: 2, kind: input, shape index: {}]
  %s3 = inlined_call_operand.vmem [shape: f32[16,64], index: 3, kind: input, shape index: {}]
  %s4 = inlined_call_operand.vmem [shape: bf16[16,16], index: 4, kind: input, shape index: {}]
  %s5 = inlined_call_operand.vmem [shape: f32[16,64], index: 5, kind: input, shape index: {}]
  %s6 = inlined_call_operand.vmem [shape: bf16[64,64], index: 6, kind: input, shape index: {}]
  %s7 = inlined_call_operand.vmem [shape: f32[16,64], index: 7, kind: input, shape index: {}]
  %s8 = inlined_call_operand.vmem [shape: bf16[64,256], index: 8, kind: input, shape index: {}]
  %s9 = inlined_call_operand.vmem [shape: f32[16,256], index: 9, kind: output, shape index: {}]
  %s10 = sld [smem:[#allocation0]]
  $region46: #{gobal_forward.1} parent=0
    _
  %s12 = ssub.s32 1, %s10
  %s13 = scalar_select 0, %s12, %s10
  // Predicated region
  $region2: #{gobal_forward.1} parent=0 // pred_check
    _
  $region3: #{gobal_forward.1} parent=0 // pred_check_branch
    %15 = sbr.rel (0) target = $region5
  $region4: #{gobal_forward.1} parent=0 // pred_region
    _
  $region5: #{gobal_forward.1} parent=0 // pred_fallthru
    _
  // Predicated region
  $region6: #{gobal_forward.1} parent=0 // pred_check
    _
  $region7: #{gobal_forward.1} parent=0 // pred_check_branch
    %17 = sbr.rel (0) target = $region9
  $region8: #{gobal_forward.1} parent=0 // pred_region
    _
  $region9: #{gobal_forward.1} parent=0 // pred_fallthru
    _
  // Predicated region
  $region10: #{gobal_forward.1} parent=0 // pred_check
    _
  $region11: #{gobal_forward.1} parent=0 // pred_check_branch
    %19 = sbr.rel (0) target = $region13
  $region12: #{gobal_forward.1} parent=0 // pred_region
    _
  $region13: #{gobal_forward.1} parent=0 // pred_fallthru
    _
  // Predicated region
  $region14: #{gobal_forward.1} parent=0 // pred_check
    _
  $region15: #{gobal_forward.1} parent=0 // pred_check_branch
    %21 = sbr.rel (0) target = $region17
  $region16: #{gobal_forward.1} parent=0 // pred_region
    _
  $region17: #{gobal_forward.1} parent=0 // pred_fallthru
    _
  // Predicated region
  $region18: #{gobal_forward.1} parent=0 // pred_check
    _
  $region19: #{gobal_forward.1} parent=0 // pred_check_branch
    %23 = sbr.rel (0) target = $region21
  $region20: #{gobal_forward.1} parent=0 // pred_region
    _
  $region21: #{gobal_forward.1} parent=0 // pred_fallthru
    _
  // Predicated region
  $region22: #{gobal_forward.1} parent=0 // pred_check
    _
  $region23: #{gobal_forward.1} parent=0 // pred_check_branch
    %25 = sbr.rel (0) target = $region25
  $region24: #{gobal_forward.1} parent=0 // pred_region
    _
  $region25: #{gobal_forward.1} parent=0 // pred_fallthru
    _
  // Predicated region
  $region26: #{gobal_forward.1} parent=0 // pred_check
    _
  $region27: #{gobal_forward.1} parent=0 // pred_check_branch
    %27 = sbr.rel (0) target = $region29
  $region28: #{gobal_forward.1} parent=0 // pred_region
    _
  $region29: #{gobal_forward.1} parent=0 // pred_fallthru
    _
  // Predicated region
  $region30: #{gobal_forward.1} parent=0 // pred_check
    _
  $region31: #{gobal_forward.1} parent=0 // pred_check_branch
    %29 = sbr.rel (0) target = $region33
  $region32: #{gobal_forward.1} parent=0 // pred_region
    _
  $region33: #{gobal_forward.1} parent=0 // pred_fallthru
    _
  // Predicated region
  $region34: #{gobal_forward.1} parent=0 // pred_check
    _
  $region35: #{gobal_forward.1} parent=0 // pred_check_branch
    %31 = sbr.rel (0) target = $region37
  $region36: #{gobal_forward.1} parent=0 // pred_region
    _
  $region37: #{gobal_forward.1} parent=0 // pred_fallthru
    _
  %v33 = vld [vmem:[%s0] sm:$0xff]
  %v34 = vld [vmem:[%s0 + $0x8] sm:$0xff]
  %v35 = vld [vmem:[%s0 + $0x10] sm:$0xff]
  %v36 = vld [vmem:[%s0 + $0x18] sm:$0xff]
  %v37 = vpack.c.bf16 %v35, %v33
  %v38 = vpack.c.bf16 %v36, %v34
  %v39 = vld [vmem:[%s1] sm:$0xf]
  %v40 = vld [vmem:[%s1 + $0x4] sm:$0xf]
  %v41 = vld [vmem:[%s1 + $0x8] sm:$0xf]
  %v42 = vld [vmem:[%s1 + $0xc] sm:$0xf]
  %v43 = vld [vmem:[%s1 + $0x10] sm:$0xf]
  %v44 = vld [vmem:[%s1 + $0x14] sm:$0xf]
  %v45 = vld [vmem:[%s1 + $0x18] sm:$0xf]
  %v46 = vld [vmem:[%s1 + $0x1c] sm:$0xf]
  %v47 = vld [vmem:[%s1 + $0x20] sm:$0xf]
  %v48 = vld [vmem:[%s1 + $0x24] sm:$0xf]
  %v49 = vld [vmem:[%s1 + $0x28] sm:$0xf]
  %v50 = vld [vmem:[%s1 + $0x2c] sm:$0xf]
  %v51 = vld [vmem:[%s1 + $0x30] sm:$0xf]
  %v52 = vld [vmem:[%s1 + $0x34] sm:$0xf]
  %v53 = vld [vmem:[%s1 + $0x38] sm:$0xf]
  %v54 = vld [vmem:[%s1 + $0x3c] sm:$0xf]
  %v55 = vld [vmem:[%s1 + $0x40] sm:$0xf]
  %v56 = vld [vmem:[%s1 + $0x44] sm:$0xf]
  %v57 = vld [vmem:[%s1 + $0x48] sm:$0xf]
  %v58 = vld [vmem:[%s1 + $0x4c] sm:$0xf]
  %v59 = vld [vmem:[%s1 + $0x50] sm:$0xf]
  %v60 = vld [vmem:[%s1 + $0x54] sm:$0xf]
  %v61 = vld [vmem:[%s1 + $0x58] sm:$0xf]
  %v62 = vld [vmem:[%s1 + $0x5c] sm:$0xf]
  %v63 = vld [vmem:[%s1 + $0x60] sm:$0xf]
  %v64 = vld [vmem:[%s1 + $0x64] sm:$0xf]
  %v65 = vld [vmem:[%s1 + $0x68] sm:$0xf]
  %v66 = vld [vmem:[%s1 + $0x6c] sm:$0xf]
  %v67 = vld [vmem:[%s1 + $0x70] sm:$0xf]
  %v68 = vld [vmem:[%s1 + $0x74] sm:$0xf]
  %v69 = vld [vmem:[%s1 + $0x78] sm:$0xf]
  %v70 = vld [vmem:[%s1 + $0x7c] sm:$0xf]
  %v103 = vunpack.c.l.b16 %v39
  %v104 = vunpack.c.l.b16 %v40
  %v105 = vunpack.c.l.b16 %v41
  %v106 = vunpack.c.l.b16 %v42
  %v107 = vunpack.c.l.b16 %v43
  %v108 = vunpack.c.l.b16 %v44
  %v109 = vunpack.c.l.b16 %v45
  %v110 = vunpack.c.l.b16 %v46
  %v111 = vunpack.c.l.b16 %v47
  %v112 = vunpack.c.l.b16 %v48
  %v113 = vunpack.c.l.b16 %v49
  %v114 = vunpack.c.l.b16 %v50
  %v115 = vunpack.c.l.b16 %v51
  %v116 = vunpack.c.l.b16 %v52
  %v117 = vunpack.c.l.b16 %v53
  %v118 = vunpack.c.l.b16 %v54
  %v119 = vunpack.c.l.b16 %v55
  %v120 = vunpack.c.l.b16 %v56
  %v121 = vunpack.c.l.b16 %v57
  %v122 = vunpack.c.l.b16 %v58
  %v123 = vunpack.c.l.b16 %v59
  %v124 = vunpack.c.l.b16 %v60
  %v125 = vunpack.c.l.b16 %v61
  %v126 = vunpack.c.l.b16 %v62
  %v127 = vunpack.c.l.b16 %v63
  %v128 = vunpack.c.l.b16 %v64
  %v129 = vunpack.c.l.b16 %v65
  %v130 = vunpack.c.l.b16 %v66
  %v131 = vunpack.c.l.b16 %v67
  %v132 = vunpack.c.l.b16 %v68
  %v133 = vunpack.c.l.b16 %v69
  %v134 = vunpack.c.l.b16 %v70
  %v135 = vpack.c.b16 %v104, %v103
  %v136 = vpack.c.b16 %v106, %v105
  %v137 = vpack.c.b16 %v108, %v107
  %v138 = vpack.c.b16 %v110, %v109
  %v139 = vpack.c.b16 %v112, %v111
  %v140 = vpack.c.b16 %v114, %v113
  %v141 = vpack.c.b16 %v116, %v115
  %v142 = vpack.c.b16 %v118, %v117
  %v143 = vpack.c.b16 %v120, %v119
  %v144 = vpack.c.b16 %v122, %v121
  %v145 = vpack.c.b16 %v124, %v123
  %v146 = vpack.c.b16 %v126, %v125
  %v147 = vpack.c.b16 %v128, %v127
  %v148 = vpack.c.b16 %v130, %v129
  %v149 = vpack.c.b16 %v132, %v131
  %v150 = vpack.c.b16 %v134, %v133
  %167 = vmatpush.bf16.msra.mxu0 %v142
  %168 = vmatpush.bf16.msra.mxu0 %v141
  %169 = vmatpush.bf16.msra.mxu0 %v140
  %170 = vmatpush.bf16.msra.mxu0 %v139
  %171 = vmatpush.bf16.msra.mxu0 %v138
  %172 = vmatpush.bf16.msra.mxu0 %v137
  %173 = vmatpush.bf16.msra.mxu0 %v136
  %174 = vmatpush.bf16.msra.mxu0 %v135
  %175 = vmatmul.bf16.gmra.mxu0 %v37
  %v176 = vpop.f32.mrf.mxu0
  %v177 = vadd.f32 0.0, %v176
  %v178 = vpop.f32.mrf.mxu0
  %v179 = vadd.f32 0.0, %v178
  %180 = vdwg.mxu0
  %181 = vmatpush.bf16.msra.mxu0 %v150
  %182 = vmatpush.bf16.msra.mxu0 %v149
  %183 = vmatpush.bf16.msra.mxu0 %v148
  %184 = vmatpush.bf16.msra.mxu0 %v147
  %185 = vmatpush.bf16.msra.mxu0 %v146
  %186 = vmatpush.bf16.msra.mxu0 %v145
  %187 = vmatpush.bf16.msra.mxu0 %v144
  %188 = vmatpush.bf16.msra.mxu0 %v143
  %189 = vmatmul.bf16.gmra.mxu0 %v38
  %v190 = vpop.f32.mrf.mxu0
  %v191 = vadd.f32 %v177, %v190
  %v192 = vpop.f32.mrf.mxu0
  %v193 = vadd.f32 %v179, %v192
  %194 = vdwg.mxu0
  %v195 = vld [vmem:[%s2] sm:$0xf]
  %v196 = vld [vmem:[%s2 + $0x4] sm:$0xf]
  %v197 = vpack.c.bf16 %v193, %v191
  %v198 = vld [vmem:[%s3] sm:$0xff]
  %v199 = vld [vmem:[%s3 + $0x8] sm:$0xff]
  %v202 = vunpack.c.l.b16 %v195
  %v203 = vunpack.c.l.b16 %v196
  %v204 = vpack.c.b16 %v203, %v202
  %vm205 = vcmask 130048
  %v207 = vsel %vm205, %v204, 0
  %209 = vmatpush.bf16.msra.mxu0 0
  %210 = vmatpush.bf16.msra.mxu0 0
  %211 = vmatpush.bf16.msra.mxu0 0
  %212 = vmatpush.bf16.msra.mxu0 0
  %213 = vmatpush.bf16.msra.mxu0 0
  %214 = vmatpush.bf16.msra.mxu0 0
  %215 = vmatpush.bf16.msra.mxu0 0
  %216 = vmatpush.bf16.msra.mxu0 %v197
  %217 = vmatmul.bf16.gmra.mxu0 %v207
  %v218 = vpop.f32.mrf.mxu0
  %v219 = vadd.f32 %v198, %v218
  %v220 = vpop.f32.mrf.mxu0
  %v221 = vadd.f32 %v199, %v220
  %222 = vdwg.mxu0
  %v223 = vmul.f32 %v219, 0.5
  %v224 = vmul.f32 %v221, 0.5
  %v225 = vmul.f32 %v219, 0.044715
  %v226 = vmul.f32 %v221, 0.044715
  %v227 = vmul.f32 %v225, %v219
  %v228 = vmul.f32 %v226, %v221
  %v229 = vmul.f32 %v227, %v219
  %v230 = vmul.f32 %v228, %v221
  %v231 = vadd.f32 %v219, %v229
  %v232 = vadd.f32 %v221, %v230
  %v233 = vmul.f32 %v231, 0.7978846
  %v234 = vmul.f32 %v232, 0.7978846
  %v235 = vtanh.pop %v233
  %v236 = vtanh.pop %v234
  %v237 = vadd.f32 %v235, 1.0
  %v238 = vadd.f32 %v236, 1.0
  %v239 = vmul.f32 %v223, %v237
  %v240 = vmul.f32 %v224, %v238
  %v241 = vld [vmem:[%s4] sm:$0xf]
  %v242 = vld [vmem:[%s4 + $0x4] sm:$0xf]
  %v243 = vpack.c.bf16 %v240, %v239
  %v244 = vld [vmem:[%s5] sm:$0xff]
  %v245 = vld [vmem:[%s5 + $0x8] sm:$0xff]
  %v248 = vunpack.c.l.b16 %v241
  %v249 = vunpack.c.l.b16 %v242
  %v250 = vpack.c.b16 %v249, %v248
  %v252 = vsel %vm205, %v250, 0
  %254 = vmatpush.bf16.msra.mxu0 0
  %255 = vmatpush.bf16.msra.mxu0 0
  %256 = vmatpush.bf16.msra.mxu0 0
  %257 = vmatpush.bf16.msra.mxu0 0
  %258 = vmatpush.bf16.msra.mxu0 0
  %259 = vmatpush.bf16.msra.mxu0 0
  %260 = vmatpush.bf16.msra.mxu0 0
  %261 = vmatpush.bf16.msra.mxu0 %v243
  %262 = vmatmul.bf16.gmra.mxu0 %v252
  %v263 = vpop.f32.mrf.mxu0
  %v264 = vadd.f32 %v244, %v263
  %v265 = vpop.f32.mrf.mxu0
  %v266 = vadd.f32 %v245, %v265
  %267 = vdwg.mxu0
  %v268 = vmul.f32 %v264, 0.5
  %v269 = vmul.f32 %v266, 0.5
  %v270 = vmul.f32 %v264, 0.044715
  %v271 = vmul.f32 %v266, 0.044715
  %v272 = vmul.f32 %v270, %v264
  %v273 = vmul.f32 %v271, %v266
  %v274 = vmul.f32 %v272, %v264
  %v275 = vmul.f32 %v273, %v266
  %v276 = vadd.f32 %v264, %v274
  %v277 = vadd.f32 %v266, %v275
  %v278 = vmul.f32 %v276, 0.7978846
  %v279 = vmul.f32 %v277, 0.7978846
  %v280 = vtanh.pop %v278
  %v281 = vtanh.pop %v279
  %v282 = vadd.f32 %v280, 1.0
  %v283 = vadd.f32 %v281, 1.0
  %v284 = vmul.f32 %v268, %v282
  %v285 = vmul.f32 %v269, %v283
  %v286 = vpack.c.bf16 %v285, %v284
  %v287 = vld [vmem:[%s6] sm:$0xf]
  %v288 = vld [vmem:[%s6 + $0x4] sm:$0xf]
  %v289 = vld [vmem:[%s6 + $0x8] sm:$0xf]
  %v290 = vld [vmem:[%s6 + $0xc] sm:$0xf]
  %v291 = vld [vmem:[%s6 + $0x10] sm:$0xf]
  %v292 = vld [vmem:[%s6 + $0x14] sm:$0xf]
  %v293 = vld [vmem:[%s6 + $0x18] sm:$0xf]
  %v294 = vld [vmem:[%s6 + $0x1c] sm:$0xf]
  %v295 = vld [vmem:[%s7] sm:$0xff]
  %v296 = vld [vmem:[%s7 + $0x8] sm:$0xff]
  %v305 = vunpack.c.l.b16 %v287
  %v306 = vunpack.c.l.b16 %v288
  %v307 = vunpack.c.l.b16 %v289
  %v308 = vunpack.c.l.b16 %v290
  %v309 = vunpack.c.l.b16 %v291
  %v310 = vunpack.c.l.b16 %v292
  %v311 = vunpack.c.l.b16 %v293
  %v312 = vunpack.c.l.b16 %v294
  %v313 = vpack.c.b16 %v306, %v305
  %v314 = vpack.c.b16 %v308, %v307
  %v315 = vpack.c.b16 %v310, %v309
  %v316 = vpack.c.b16 %v312, %v311
  %vm321 = vcmask 523264
  %v323 = vsel %vm321, %v286, 0
  %325 = vmatpush.bf16.msra.mxu0 0
  %326 = vmatpush.bf16.msra.mxu0 0
  %327 = vmatpush.bf16.msra.mxu0 0
  %328 = vmatpush.bf16.msra.mxu0 0
  %329 = vmatpush.bf16.msra.mxu0 %v316
  %330 = vmatpush.bf16.msra.mxu0 %v315
  %331 = vmatpush.bf16.msra.mxu0 %v314
  %332 = vmatpush.bf16.msra.mxu0 %v313
  %333 = vmatmul.bf16.gmra.mxu0 %v323
  %v334 = vpop.f32.mrf.mxu0
  %v335 = vadd.f32 %v295, %v334
  %v336 = vpop.f32.mrf.mxu0
  %v337 = vadd.f32 %v296, %v336
  %338 = vdwg.mxu0
  %v339 = vxor.u32 %v335, 2147483648
  %v340 = vxor.u32 %v337, 2147483648
  %v341 = vmul.f32 %v339, 1.442695
  %v342 = vpow.pop %v341
  %v343 = vmul.f32 %v340, 1.442695
  %v344 = vpow.pop %v343
  %v345 = vadd.f32 %v342, 1.0
  %v346 = vadd.f32 %v344, 1.0
  %v347 = vrcp.pop %v345
  %v348 = vmul.f32 %v345, %v347
  %v349 = vsub.f32 1.0, %v348
  %v350 = vmul.f32 %v347, %v349
  %v351 = vadd.f32 %v347, %v350
  %vm352 = vweird.f32 %v345
  %vm353 = vweird.f32 %v347
  %vm354 = vmor %vm352, %vm353
  %v355 = vsel %vm354, %v347, %v351
  %v356 = vand.u32 2147483647, %v345
  %vm357 = vcmp.eq.f32.partialorder %v356, 8.507059e+37
  %v358 = vand.u32 %v345, 2147483648
  %v359 = vor.u32 1.1754944e-38, %v358
  %v360 = vsel %vm357, %v359, %v355
  %v361 = vmul.f32 1.0, %v360
  %v362 = vrcp.pop %v346
  %v363 = vmul.f32 %v346, %v362
  %v364 = vsub.f32 1.0, %v363
  %v365 = vmul.f32 %v362, %v364
  %v366 = vadd.f32 %v362, %v365
  %vm367 = vweird.f32 %v346
  %vm368 = vweird.f32 %v362
  %vm369 = vmor %vm367, %vm368
  %v370 = vsel %vm369, %v362, %v366
  %v371 = vand.u32 2147483647, %v346
  %vm372 = vcmp.eq.f32.partialorder %v371, 8.507059e+37
  %v373 = vand.u32 %v346, 2147483648
  %v374 = vor.u32 1.1754944e-38, %v373
  %v375 = vsel %vm372, %v374, %v370
  %v376 = vmul.f32 1.0, %v375
  %v377 = vpack.c.bf16 %v376, %v361
  %v378 = vld [vmem:[%s8] sm:$0xff]
  %v379 = vld [vmem:[%s8 + $0x8] sm:$0xff]
  %v380 = vld [vmem:[%s8 + $0x10] sm:$0xff]
  %v381 = vld [vmem:[%s8 + $0x18] sm:$0xff]
  %v382 = vld [vmem:[%s8 + $0x20] sm:$0xff]
  %v383 = vld [vmem:[%s8 + $0x28] sm:$0xff]
  %v384 = vld [vmem:[%s8 + $0x30] sm:$0xff]
  %v385 = vld [vmem:[%s8 + $0x38] sm:$0xff]
  %v394 = vunpack.c.l.b16 %v378
  %v395 = vunpack.c.h.b16 %v378
  %v396 = vunpack.c.l.b16 %v379
  %v397 = vunpack.c.h.b16 %v379
  %v398 = vunpack.c.l.b16 %v380
  %v399 = vunpack.c.h.b16 %v380
  %v400 = vunpack.c.l.b16 %v381
  %v401 = vunpack.c.h.b16 %v381
  %v402 = vunpack.c.l.b16 %v382
  %v403 = vunpack.c.h.b16 %v382
  %v404 = vunpack.c.l.b16 %v383
  %v405 = vunpack.c.h.b16 %v383
  %v406 = vunpack.c.l.b16 %v384
  %v407 = vunpack.c.h.b16 %v384
  %v408 = vunpack.c.l.b16 %v385
  %v409 = vunpack.c.h.b16 %v385
  %v410 = vpack.c.b16 %v396, %v394
  %v411 = vpack.c.b16 %v397, %v395
  %v412 = vpack.c.b16 %v400, %v398
  %v413 = vpack.c.b16 %v401, %v399
  %v414 = vpack.c.b16 %v404, %v402
  %v415 = vpack.c.b16 %v405, %v403
  %v416 = vpack.c.b16 %v408, %v406
  %v417 = vpack.c.b16 %v409, %v407
  %v427 = vsel %vm321, %v377, 0
  %429 = vmatpush.bf16.msra.mxu0 0
  %430 = vmatpush.bf16.msra.mxu0 0
  %431 = vmatpush.bf16.msra.mxu0 0
  %432 = vmatpush.bf16.msra.mxu0 0
  %433 = vmatpush.bf16.msra.mxu0 %v416
  %434 = vmatpush.bf16.msra.mxu0 %v414
  %435 = vmatpush.bf16.msra.mxu0 %v412
  %436 = vmatpush.bf16.msra.mxu0 %v410
  %437 = vmatmul.bf16.gmra.mxu0 %v427
  %v438 = vpop.f32.mrf.mxu0
  %v439 = vadd.f32 0.0, %v438
  %v440 = vpop.f32.mrf.mxu0
  %v441 = vadd.f32 0.0, %v440
  %442 = vdwg.mxu0
  %443 = vmatpush.bf16.msra.mxu0 0
  %444 = vmatpush.bf16.msra.mxu0 0
  %445 = vmatpush.bf16.msra.mxu0 0
  %446 = vmatpush.bf16.msra.mxu0 0
  %447 = vmatpush.bf16.msra.mxu0 %v417
  %448 = vmatpush.bf16.msra.mxu0 %v415
  %449 = vmatpush.bf16.msra.mxu0 %v413
  %450 = vmatpush.bf16.msra.mxu0 %v411
  %451 = vmatmul.bf16.gmra.mxu0 %v427
  %v452 = vpop.f32.mrf.mxu0
  %v453 = vadd.f32 0.0, %v452
  %v454 = vpop.f32.mrf.mxu0
  %v455 = vadd.f32 0.0, %v454
  %456 = vdwg.mxu0
  %v457 = vmul.f32 %v33, %v439
  %v458 = vmul.f32 %v34, %v453
  %v459 = vmul.f32 %v35, %v441
  %v460 = vmul.f32 %v36, %v455
  %461 = vst [vmem:[%s9] sm:$0xff] %v457
  %462 = vst [vmem:[%s9 + $0x8] sm:$0xff] %v458
  %463 = vst [vmem:[%s9 + $0x10] sm:$0xff] %v459
  %464 = vst [vmem:[%s9 + $0x18] sm:$0xff] %v460
  // Predicated region
  $region38: #{gobal_forward.1} parent=0 // pred_check
    _
  $region39: #{gobal_forward.1} parent=0 // pred_check_branch
    %466 = sbr.rel (0) target = $region41
  $region40: #{gobal_forward.1} parent=0 // pred_region
    _
  $region41: #{gobal_forward.1} parent=0 // pred_fallthru
    _
  // Predicated region
  $region42: #{gobal_forward.1} parent=0 // pred_check
    _
  $region43: #{gobal_forward.1} parent=0 // pred_check_branch
    %468 = sbr.rel (0) target = $region45
  $region44: #{gobal_forward.1} parent=0 // pred_region
    _
  $region45: #{gobal_forward.1} parent=0 // pred_fallthru
    _

</llo_original>
